<compile_context>
chip_gen: v5e
topology: v5e:2x2
jax: 0.10.0
libtpu: 0.0.40
codegen_flags: <defaults>
</compile_context>

<pallas_src>
import functools

import jax
import jax.numpy as jnp
from jax.experimental import pallas as pl
from jax.experimental.pallas import tpu as pltpu


def _round_up(n, m):
    return -(-n // m) * m


def _slab_offsets(d_in1, hidden):
    """Row offsets of each parameter section inside the packed weight slab.
    Every section starts on a multiple of 8 sublanes (cheap static slices)."""
    sizes = (("wx1", d_in1), ("b1", 1), ("wh1", 2 * hidden),
             ("wx2", 2 * hidden), ("b2", 1), ("wh2", 2 * hidden))
    off, row = {}, 0
    for name, n in sizes:
        off[name] = (row, row + n)
        row = _round_up(row + n, 8)
    off["total"] = row
    return off


# ----------------------------------------------------------------------------
# Pallas kernel: two fused bidirectional LSTM layers, packed-sequence semantics
# ----------------------------------------------------------------------------
def _evolution_kernel(x_ref, lens_ref, w_ref, out_ref):
    """x_ref   : (T*B, D)   time-major input, row index = t*B + b
       lens_ref: (B, 1)     float32 cascade lengths (0 for padded batch rows)
       w_ref   : (R, 8H)    packed weight slab, see pack_weight_slab()
       out_ref : (T*B, 4H)  [layer1 fwd|bwd , layer2 fwd|bwd] per (t, b) row
    """
    TB, D = x_ref.shape
    B = lens_ref.shape[0]
    T = TB // B
    H = out_ref.shape[1] // 4
    H2, H6, H8 = 2 * H, 6 * H, 8 * H
    off = _slab_offsets(D, H)

    def sl(name):
        s, e = off[name]
        return w_ref[s:e, :]

    wx1, b1, wh1 = sl("wx1"), sl("b1"), sl("wh1")
    wx2, b2, wh2 = sl("wx2"), sl("b2"), sl("wh2")

    # --- hoisted lane selectors / per-step masks (off the serial chain) -----
    lane2 = jax.lax.broadcasted_iota(jnp.int32, (B, H2), 1)
    lane8 = jax.lax.broadcasted_iota(jnp.int32, (B, H8), 1)
    is_fwd2 = lane2 < H                                   # [fwd | bwd] halves
    if H2 & (H2 - 1) == 0:
        gate_pos = jnp.bitwise_and(lane8, H2 - 1)         # pos within 2H group
    else:
        gate_pos = lane8 % H2
    is_fwd8 = gate_pos < H                                # fwd gate columns

    lens = lens_ref[...]                                  # (B, 1) f32
    vf = [jnp.where(lens > t, 1.0, 0.0) for t in range(T)]
    # per-step (B, 2H) validity: fwd half = time s, bwd half = time T-1-s
    smask = [jnp.where(is_fwd2, vf[s], vf[T - 1 - s]) > 0.5 for s in range(T)]

    def bilstm(x_flat, wx, b, wh):
        # one batched input projection for all T timesteps (off the chain)
        gx_all = jnp.dot(x_flat, wx, preferred_element_type=jnp.float32) + b
        gx = [gx_all[t * B:(t + 1) * B, :] for t in range(T)]     # (B, 8H)
        # merged gate input: fwd columns from t=s, bwd columns from t=T-1-s
        gmer = [jnp.where(is_fwd8, gx[s], gx[T - 1 - s]) for s in range(T)]

        h = jnp.zeros((B, H2), jnp.float32)
        c = jnp.zeros((B, H2), jnp.float32)
        outs = [None] * T
        for s in range(T):                    # fully unrolled (static, tiny T)
            # only h @ Wh_blockdiag + activations sit on the serial chain
            gates = gmer[s] + jnp.dot(h, wh,
                                      preferred_element_type=jnp.float32)
            sg = jax.nn.sigmoid(gates[:, :H6])            # [i | f | o]
            gg = jnp.tanh(gates[:, H6:])                  # g
            c_new = sg[:, H2:2 * H2] * c + sg[:, :H2] * gg
            h_new = sg[:, 2 * H2:] * jnp.tanh(c_new)
            m = smask[s]
            h = jnp.where(m, h_new, h)    # packed-seq: freeze state on padding
            c = jnp.where(m, c_new, c)
            outs[s] = jnp.where(m, h_new, 0.0)            # padded outputs = 0
        # re-time the bwd half: step s's bwd output belongs to time T-1-s
        rows = [jnp.where(is_fwd2, outs[t], outs[T - 1 - t]) for t in range(T)]
        return jnp.concatenate(rows, axis=0)              # (T*B, 2H)

    out1 = bilstm(x_ref[...], wx1, b1, wh1)               # layer-1 [fwd|bwd]
    out2 = bilstm(out1, wx2, b2, wh2)                     # layer-2 [fwd|bwd]
    out_ref[...] = jnp.concatenate([out1, out2], axis=-1)   # one bulk store


# ----------------------------------------------------------------------------
# Parameter init (PyTorch nn.LSTM-style uniform(-1/sqrt(H), 1/sqrt(H))),
# stored transposed (Din,4H)/(H,4H) with PyTorch gate column order (i,f,g,o).
# ----------------------------------------------------------------------------
def init_lstm_params(key, input_size, hidden_size):
    H = hidden_size
    k = 1.0 / float(H) ** 0.5
    keys = jax.random.split(key, 8)

    def u(kk, shape):
        return jax.random.uniform(kk, shape, jnp.float32, -k, k)

    return dict(
        wih_f=u(keys[0], (input_size, 4 * H)),      # weight_ih_l0 (transposed)
        whh_f=u(keys[1], (H, 4 * H)),               # weight_hh_l0 (transposed)
        b_f=u(keys[2], (1, 4 * H)) + u(keys[3], (1, 4 * H)),   # b_ih + b_hh
        wih_b=u(keys[4], (input_size, 4 * H)),      # *_reverse
        whh_b=u(keys[5], (H, 4 * H)),
        b_b=u(keys[6], (1, 4 * H)) + u(keys[7], (1, 4 * H)),
    )


def _pack_gate_grouped(w_f, w_b):
    """(.., 4H) per-direction columns in PyTorch gate order (i, f, g, o) ->
    (.., 8H) grouped by gate across directions [i_f i_b|f_f f_b|o_f o_b|g_f g_b]."""
    H = w_f.shape[-1] // 4

    def g(w, k):
        return w[..., k * H:(k + 1) * H]

    return jnp.concatenate([g(w_f, 0), g(w_b, 0),    # i
                            g(w_f, 1), g(w_b, 1),    # f
                            g(w_f, 3), g(w_b, 3),    # o
                            g(w_f, 2), g(w_b, 2)],   # g
                           axis=-1)


def _pack_layer(p):
    wx = _pack_gate_grouped(p["wih_f"], p["wih_b"])              # (Din, 8H)
    b = _pack_gate_grouped(p["b_f"], p["b_b"])                   # (1, 8H)
    zero = jnp.zeros_like(p["whh_f"])
    wh = jnp.concatenate([_pack_gate_grouped(p["whh_f"], zero),  # h_f rows
                          _pack_gate_grouped(zero, p["whh_b"])], # h_b rows
                         axis=0)                                 # (2H,8H) blk-diag
    return wx, b, wh


def pack_weight_slab(p1, p2, d_in1, hidden):
    """All parameters of both layers packed into one lane-dense (R, 8H) slab."""
    parts = dict(zip(("wx1", "b1", "wh1"), _pack_layer(p1)))
    parts.update(zip(("wx2", "b2", "wh2"), _pack_layer(p2)))
    off = _slab_offsets(d_in1, hidden)
    slab = jnp.zeros((off["total"], 8 * hidden), jnp.float32)
    for name, w in parts.items():
        s, e = off[name]
        slab = slab.at[s:e, :].set(w)
    return slab


# ----------------------------------------------------------------------------
# Evolution.forward equivalent
# ----------------------------------------------------------------------------
def split_cascade(x, edge_order):
    """Host-side glue: split the flat sentence tensor into padded cascades.
    Returns the padded tensor in TIME-MAJOR (T, B_cas, F) layout plus the
    batch-first mask (B_cas, T) that the original module returns."""
    edge_order = list(edge_order)
    source_index = [i for i in range(len(edge_order)) if edge_order[i] == -1]
    source_index = source_index + [len(edge_order)]
    cas_index = [(source_index[i], source_index[i + 1])
                 for i in range(len(source_index) - 1)]
    split_list = [e - s for (s, e) in cas_index]
    max_len = max(split_list)
    x_tm = jnp.stack(
        [jnp.pad(x[s:e], ((0, max_len - (e - s)), (0, 0)))
         for (s, e) in cas_index], axis=1)                      # (T, B_cas, F)
    x_mask = jnp.array(
        [[1.0] * n + [0.0] * (max_len - n) for n in split_list],
        dtype=jnp.float32)                                       # (B_cas, T)
    return x_tm, x_mask, split_list


def evolution_forward(x, edge_order, params_seq1, params_seq2):
    # x: (batch_sent, inter_size + sent_size)
    x_tm, x_mask, split_list = split_cascade(x, edge_order)
    T, Bc, D = x_tm.shape
    H = params_seq1["whh_f"].shape[0]

    Bp = _round_up(Bc, 8)                       # pad batch to a sublane tile
    x_pad = jnp.pad(x_tm, ((0, 0), (0, Bp - Bc), (0, 0))).astype(jnp.float32)
    x_flat = x_pad.reshape(T * Bp, D)           # row = t*Bp + b
    lens = jnp.pad(jnp.asarray(split_list, jnp.float32), (0, Bp - Bc))
    lens = lens.reshape(Bp, 1)
    w_slab = pack_weight_slab(params_seq1, params_seq2, D, H)

    vmem = pl.BlockSpec(memory_space=pltpu.MemorySpace.VMEM)
    out = pl.pallas_call(
        _evolution_kernel,
        out_shape=jax.ShapeDtypeStruct((T * Bp, 4 * H), jnp.float32),
        in_specs=[vmem, vmem, vmem],
        out_specs=vmem,
    )(x_flat, lens, w_slab)

    out = out.reshape(T, Bp, 4 * H)[:, :Bc, :]
    out1_tm = out[:, :, :2 * H]                 # layer-1 [fwd|bwd], time-major
    out2_tm = out[:, :, 2 * H:]                 # layer-2 [fwd|bwd], time-major

    # sent is built from layer1 (as in the reference module), un-padded.
    sent = jnp.concatenate(
        [out1_tm[:split_list[i], i, :] for i in range(Bc)], axis=0)
    layer2 = jnp.transpose(out2_tm, (1, 0, 2))  # (B_cas, T, 2H), batch-first
    return sent, layer2, x_mask


# ----------------------------------------------------------------------------
# TODO(synk): bf16 matmul operands (f32 accumulation) would cut per-step MXU
#             latency further; kept f32 pending numerics validation vs ref.
# TODO(synk): for large cascade batches, add a batch-block "parallel" grid axis
#             (v7x 2-TC sharding); at B=3 launch/sync cost exceeds the win.
# TODO(synk): num_layers fixed to 1 (as in the synthetic args); adjacency_list
#             and node_order are accepted by the reference forward but unused.
# ----------------------------------------------------------------------------
if __name__ == "__main__":
    inter_size, sent_size, hidden_size = 8, 8, 16
    D = inter_size + sent_size

    # edge_order: -1 marks the source node of each cascade.
    # Cascades of lengths [3, 5, 2] -> batch_sent = 10, padded T = 5.
    edge_order = [-1, 0, 1, -1, 0, 1, 2, 3, -1, 0]
    batch_sent = len(edge_order)

    key = jax.random.PRNGKey(0)
    kx, k1, k2 = jax.random.split(key, 3)

    x = jax.random.normal(kx, (batch_sent, D), dtype=jnp.float32)
    params_seq1 = init_lstm_params(k1, D, hidden_size)
    params_seq2 = init_lstm_params(k2, 2 * hidden_size, hidden_size)

    fwd = jax.jit(functools.partial(evolution_forward, edge_order=edge_order,
                                    params_seq1=params_seq1,
                                    params_seq2=params_seq2))
    sent, layer2, x_mask = fwd(x)
    jax.block_until_ready((sent, layer2, x_mask))

    assert sent.shape == (batch_sent, 2 * hidden_size)
    assert layer2.shape == (3, 5, 2 * hidden_size)
    assert x_mask.shape == (3, 5)
    print("KERNEL_OK")
</pallas_src>

<mosaic_0001>
module attributes {stable_mosaic.version = 11 : i64} {
  func.func @_evolution_kernel(%arg0: memref<40x16xf32, #tpu.memory_space<vmem>>, %arg1: memref<8x1xf32, #tpu.memory_space<vmem>>, %arg2: memref<128x128xf32, #tpu.memory_space<vmem>>, %arg3: memref<40x64xf32, #tpu.memory_space<vmem>>) attributes {dimension_semantics = [], scalar_prefetch = 0 : i64, scratch_operands = 0 : i64, tpu.core_type = #tpu.core_type<tc>} {
    %c0 = arith.constant 0 : index
    %c0_0 = arith.constant 0 : index
    %0 = vector.load %arg2[%c0, %c0_0] : memref<128x128xf32, #tpu.memory_space<vmem>>, vector<16x128xf32>
    %c16 = arith.constant 16 : index
    %c0_1 = arith.constant 0 : index
    %1 = vector.load %arg2[%c16, %c0_1] : memref<128x128xf32, #tpu.memory_space<vmem>>, vector<1x128xf32>
    %c24 = arith.constant 24 : index
    %c0_2 = arith.constant 0 : index
    %2 = vector.load %arg2[%c24, %c0_2] : memref<128x128xf32, #tpu.memory_space<vmem>>, vector<32x128xf32>
    %c56 = arith.constant 56 : index
    %c0_3 = arith.constant 0 : index
    %3 = vector.load %arg2[%c56, %c0_3] : memref<128x128xf32, #tpu.memory_space<vmem>>, vector<32x128xf32>
    %c88 = arith.constant 88 : index
    %c0_4 = arith.constant 0 : index
    %4 = vector.load %arg2[%c88, %c0_4] : memref<128x128xf32, #tpu.memory_space<vmem>>, vector<1x128xf32>
    %c96 = arith.constant 96 : index
    %c0_5 = arith.constant 0 : index
    %5 = vector.load %arg2[%c96, %c0_5] : memref<128x128xf32, #tpu.memory_space<vmem>>, vector<32x128xf32>
    %6 = tpu.iota {dimensions = array<i32: 1>} : vector<8x32xi32>
    %7 = tpu.iota {dimensions = array<i32: 1>} : vector<8x128xi32>
    %c16_i32 = arith.constant 16 : i32
    %8 = vector.broadcast %c16_i32 : i32 to vector<8x32xi32>
    %9 = arith.cmpi slt, %6, %8 : vector<8x32xi32>
    %c31_i32 = arith.constant 31 : i32
    %10 = vector.broadcast %c31_i32 : i32 to vector<8x128xi32>
    %11 = arith.andi %7, %10 : vector<8x128xi32>
    %c16_i32_6 = arith.constant 16 : i32
    %12 = vector.broadcast %c16_i32_6 : i32 to vector<8x128xi32>
    %13 = arith.cmpi slt, %11, %12 : vector<8x128xi32>
    %c0_7 = arith.constant 0 : index
    %c0_8 = arith.constant 0 : index
    %14 = vector.load %arg1[%c0_7, %c0_8] : memref<8x1xf32, #tpu.memory_space<vmem>>, vector<8x1xf32>
    %cst = arith.constant 0.000000e+00 : f32
    %15 = vector.broadcast %cst : f32 to vector<8x1xf32>
    %16 = arith.cmpf ogt, %14, %15 : vector<8x1xf32>
    %cst_9 = arith.constant 1.000000e+00 : f32
    %cst_10 = arith.constant 0.000000e+00 : f32
    %17 = vector.broadcast %cst_9 : f32 to vector<8x1xf32>
    %18 = vector.broadcast %cst_10 : f32 to vector<8x1xf32>
    %19 = arith.select %16, %17, %18 : vector<8x1xi1>, vector<8x1xf32>
    %cst_11 = arith.constant 1.000000e+00 : f32
    %20 = vector.broadcast %cst_11 : f32 to vector<8x1xf32>
    %21 = arith.cmpf ogt, %14, %20 : vector<8x1xf32>
    %cst_12 = arith.constant 1.000000e+00 : f32
    %cst_13 = arith.constant 0.000000e+00 : f32
    %22 = vector.broadcast %cst_12 : f32 to vector<8x1xf32>
    %23 = vector.broadcast %cst_13 : f32 to vector<8x1xf32>
    %24 = arith.select %21, %22, %23 : vector<8x1xi1>, vector<8x1xf32>
    %cst_14 = arith.constant 2.000000e+00 : f32
    %25 = vector.broadcast %cst_14 : f32 to vector<8x1xf32>
    %26 = arith.cmpf ogt, %14, %25 : vector<8x1xf32>
    %cst_15 = arith.constant 1.000000e+00 : f32
    %cst_16 = arith.constant 0.000000e+00 : f32
    %27 = vector.broadcast %cst_15 : f32 to vector<8x1xf32>
    %28 = vector.broadcast %cst_16 : f32 to vector<8x1xf32>
    %29 = arith.select %26, %27, %28 : vector<8x1xi1>, vector<8x1xf32>
    %cst_17 = arith.constant 3.000000e+00 : f32
    %30 = vector.broadcast %cst_17 : f32 to vector<8x1xf32>
    %31 = arith.cmpf ogt, %14, %30 : vector<8x1xf32>
    %cst_18 = arith.constant 1.000000e+00 : f32
    %cst_19 = arith.constant 0.000000e+00 : f32
    %32 = vector.broadcast %cst_18 : f32 to vector<8x1xf32>
    %33 = vector.broadcast %cst_19 : f32 to vector<8x1xf32>
    %34 = arith.select %31, %32, %33 : vector<8x1xi1>, vector<8x1xf32>
    %cst_20 = arith.constant 4.000000e+00 : f32
    %35 = vector.broadcast %cst_20 : f32 to vector<8x1xf32>
    %36 = arith.cmpf ogt, %14, %35 : vector<8x1xf32>
    %cst_21 = arith.constant 1.000000e+00 : f32
    %cst_22 = arith.constant 0.000000e+00 : f32
    %37 = vector.broadcast %cst_21 : f32 to vector<8x1xf32>
    %38 = vector.broadcast %cst_22 : f32 to vector<8x1xf32>
    %39 = arith.select %36, %37, %38 : vector<8x1xi1>, vector<8x1xf32>
    %40 = vector.shape_cast %19 : vector<8x1xf32> to vector<8x1xf32>
    %41 = vector.broadcast %40 : vector<8x1xf32> to vector<8x32xf32>
    %42 = vector.shape_cast %39 : vector<8x1xf32> to vector<8x1xf32>
    %43 = vector.broadcast %42 : vector<8x1xf32> to vector<8x32xf32>
    %44 = arith.select %9, %41, %43 : vector<8x32xi1>, vector<8x32xf32>
    %cst_23 = arith.constant 5.000000e-01 : f32
    %45 = vector.broadcast %cst_23 : f32 to vector<8x32xf32>
    %46 = arith.cmpf ogt, %44, %45 : vector<8x32xf32>
    %47 = vector.shape_cast %24 : vector<8x1xf32> to vector<8x1xf32>
    %48 = vector.broadcast %47 : vector<8x1xf32> to vector<8x32xf32>
    %49 = vector.shape_cast %34 : vector<8x1xf32> to vector<8x1xf32>
    %50 = vector.broadcast %49 : vector<8x1xf32> to vector<8x32xf32>
    %51 = arith.select %9, %48, %50 : vector<8x32xi1>, vector<8x32xf32>
    %cst_24 = arith.constant 5.000000e-01 : f32
    %52 = vector.broadcast %cst_24 : f32 to vector<8x32xf32>
    %53 = arith.cmpf ogt, %51, %52 : vector<8x32xf32>
    %54 = vector.shape_cast %29 : vector<8x1xf32> to vector<8x1xf32>
    %55 = vector.broadcast %54 : vector<8x1xf32> to vector<8x32xf32>
    %56 = vector.shape_cast %29 : vector<8x1xf32> to vector<8x1xf32>
    %57 = vector.broadcast %56 : vector<8x1xf32> to vector<8x32xf32>
    %58 = arith.select %9, %55, %57 : vector<8x32xi1>, vector<8x32xf32>
    %cst_25 = arith.constant 5.000000e-01 : f32
    %59 = vector.broadcast %cst_25 : f32 to vector<8x32xf32>
    %60 = arith.cmpf ogt, %58, %59 : vector<8x32xf32>
    %61 = vector.shape_cast %34 : vector<8x1xf32> to vector<8x1xf32>
    %62 = vector.broadcast %61 : vector<8x1xf32> to vector<8x32xf32>
    %63 = vector.shape_cast %24 : vector<8x1xf32> to vector<8x1xf32>
    %64 = vector.broadcast %63 : vector<8x1xf32> to vector<8x32xf32>
    %65 = arith.select %9, %62, %64 : vector<8x32xi1>, vector<8x32xf32>
    %cst_26 = arith.constant 5.000000e-01 : f32
    %66 = vector.broadcast %cst_26 : f32 to vector<8x32xf32>
    %67 = arith.cmpf ogt, %65, %66 : vector<8x32xf32>
    %68 = vector.shape_cast %39 : vector<8x1xf32> to vector<8x1xf32>
    %69 = vector.broadcast %68 : vector<8x1xf32> to vector<8x32xf32>
    %70 = vector.shape_cast %19 : vector<8x1xf32> to vector<8x1xf32>
    %71 = vector.broadcast %70 : vector<8x1xf32> to vector<8x32xf32>
    %72 = arith.select %9, %69, %71 : vector<8x32xi1>, vector<8x32xf32>
    %cst_27 = arith.constant 5.000000e-01 : f32
    %73 = vector.broadcast %cst_27 : f32 to vector<8x32xf32>
    %74 = arith.cmpf ogt, %72, %73 : vector<8x32xf32>
    %c0_28 = arith.constant 0 : index
    %c0_29 = arith.constant 0 : index
    %75 = vector.load %arg0[%c0_28, %c0_29] : memref<40x16xf32, #tpu.memory_space<vmem>>, vector<40x16xf32>
    %cst_30 = arith.constant dense<0.000000e+00> : vector<40x128xf32>
    %76 = tpu.matmul %75, %0, %cst_30 {dimension_numbers = #tpu.dot_dimension_numbers<[1], [0], [0], [1], [0, 0, 1, 1], [], []>} : vector<40x16xf32>, vector<16x128xf32>, vector<40x128xf32> -> vector<40x128xf32>
    %77 = vector.broadcast %1 : vector<1x128xf32> to vector<40x128xf32>
    %78 = arith.addf %76, %77 : vector<40x128xf32>
    %79 = vector.extract_strided_slice %78 {offsets = [0, 0], sizes = [8, 128], strides = [1, 1]} : vector<40x128xf32> to vector<8x128xf32>
    %80 = vector.extract_strided_slice %78 {offsets = [8, 0], sizes = [8, 128], strides = [1, 1]} : vector<40x128xf32> to vector<8x128xf32>
    %81 = vector.extract_strided_slice %78 {offsets = [16, 0], sizes = [8, 128], strides = [1, 1]} : vector<40x128xf32> to vector<8x128xf32>
    %82 = vector.extract_strided_slice %78 {offsets = [24, 0], sizes = [8, 128], strides = [1, 1]} : vector<40x128xf32> to vector<8x128xf32>
    %83 = vector.extract_strided_slice %78 {offsets = [32, 0], sizes = [8, 128], strides = [1, 1]} : vector<40x128xf32> to vector<8x128xf32>
    %84 = arith.select %13, %79, %83 : vector<8x128xi1>, vector<8x128xf32>
    %85 = arith.select %13, %80, %82 : vector<8x128xi1>, vector<8x128xf32>
    %86 = arith.select %13, %81, %81 : vector<8x128xi1>, vector<8x128xf32>
    %87 = arith.select %13, %82, %80 : vector<8x128xi1>, vector<8x128xf32>
    %88 = arith.select %13, %83, %79 : vector<8x128xi1>, vector<8x128xf32>
    %cst_31 = arith.constant 0.000000e+00 : f32
    %89 = vector.broadcast %cst_31 : f32 to vector<8x32xf32>
    %cst_32 = arith.constant 0.000000e+00 : f32
    %90 = vector.broadcast %cst_32 : f32 to vector<8x32xf32>
    %cst_33 = arith.constant dense<0.000000e+00> : vector<8x128xf32>
    %91 = tpu.matmul %89, %2, %cst_33 {dimension_numbers = #tpu.dot_dimension_numbers<[1], [0], [0], [1], [0, 0, 1, 1], [], []>} : vector<8x32xf32>, vector<32x128xf32>, vector<8x128xf32> -> vector<8x128xf32>
    %92 = arith.addf %84, %91 : vector<8x128xf32>
    %93 = vector.extract_strided_slice %92 {offsets = [0, 0], sizes = [8, 96], strides = [1, 1]} : vector<8x128xf32> to vector<8x96xf32>
    %94 = arith.negf %93 : vector<8x96xf32>
    %95 = math.exp %94 : vector<8x96xf32>
    %cst_34 = arith.constant 1.000000e+00 : f32
    %96 = vector.broadcast %cst_34 : f32 to vector<8x96xf32>
    %97 = arith.addf %96, %95 : vector<8x96xf32>
    %98 = arith.divf %96, %97 : vector<8x96xf32>
    %99 = vector.extract_strided_slice %92 {offsets = [0, 96], sizes = [8, 32], strides = [1, 1]} : vector<8x128xf32> to vector<8x32xf32>
    %100 = math.tanh %99 : vector<8x32xf32>
    %101 = vector.extract_strided_slice %98 {offsets = [0, 32], sizes = [8, 32], strides = [1, 1]} : vector<8x96xf32> to vector<8x32xf32>
    %102 = arith.mulf %101, %90 : vector<8x32xf32>
    %103 = vector.extract_strided_slice %98 {offsets = [0, 0], sizes = [8, 32], strides = [1, 1]} : vector<8x96xf32> to vector<8x32xf32>
    %104 = arith.mulf %103, %100 : vector<8x32xf32>
    %105 = arith.addf %102, %104 : vector<8x32xf32>
    %106 = vector.extract_strided_slice %98 {offsets = [0, 64], sizes = [8, 32], strides = [1, 1]} : vector<8x96xf32> to vector<8x32xf32>
    %107 = math.tanh %105 : vector<8x32xf32>
    %108 = arith.mulf %106, %107 : vector<8x32xf32>
    %109 = arith.select %46, %108, %89 : vector<8x32xi1>, vector<8x32xf32>
    %110 = arith.select %46, %105, %90 : vector<8x32xi1>, vector<8x32xf32>
    %cst_35 = arith.constant 0.000000e+00 : f32
    %111 = vector.broadcast %cst_35 : f32 to vector<8x32xf32>
    %112 = arith.select %46, %108, %111 : vector<8x32xi1>, vector<8x32xf32>
    %cst_36 = arith.constant dense<0.000000e+00> : vector<8x128xf32>
    %113 = tpu.matmul %109, %2, %cst_36 {dimension_numbers = #tpu.dot_dimension_numbers<[1], [0], [0], [1], [0, 0, 1, 1], [], []>} : vector<8x32xf32>, vector<32x128xf32>, vector<8x128xf32> -> vector<8x128xf32>
    %114 = arith.addf %85, %113 : vector<8x128xf32>
    %115 = vector.extract_strided_slice %114 {offsets = [0, 0], sizes = [8, 96], strides = [1, 1]} : vector<8x128xf32> to vector<8x96xf32>
    %116 = arith.negf %115 : vector<8x96xf32>
    %117 = math.exp %116 : vector<8x96xf32>
    %cst_37 = arith.constant 1.000000e+00 : f32
    %118 = vector.broadcast %cst_37 : f32 to vector<8x96xf32>
    %119 = arith.addf %118, %117 : vector<8x96xf32>
    %120 = arith.divf %118, %119 : vector<8x96xf32>
    %121 = vector.extract_strided_slice %114 {offsets = [0, 96], sizes = [8, 32], strides = [1, 1]} : vector<8x128xf32> to vector<8x32xf32>
    %122 = math.tanh %121 : vector<8x32xf32>
    %123 = vector.extract_strided_slice %120 {offsets = [0, 32], sizes = [8, 32], strides = [1, 1]} : vector<8x96xf32> to vector<8x32xf32>
    %124 = arith.mulf %123, %110 : vector<8x32xf32>
    %125 = vector.extract_strided_slice %120 {offsets = [0, 0], sizes = [8, 32], strides = [1, 1]} : vector<8x96xf32> to vector<8x32xf32>
    %126 = arith.mulf %125, %122 : vector<8x32xf32>
    %127 = arith.addf %124, %126 : vector<8x32xf32>
    %128 = vector.extract_strided_slice %120 {offsets = [0, 64], sizes = [8, 32], strides = [1, 1]} : vector<8x96xf32> to vector<8x32xf32>
    %129 = math.tanh %127 : vector<8x32xf32>
    %130 = arith.mulf %128, %129 : vector<8x32xf32>
    %131 = arith.select %53, %130, %109 : vector<8x32xi1>, vector<8x32xf32>
    %132 = arith.select %53, %127, %110 : vector<8x32xi1>, vector<8x32xf32>
    %cst_38 = arith.constant 0.000000e+00 : f32
    %133 = vector.broadcast %cst_38 : f32 to vector<8x32xf32>
    %134 = arith.select %53, %130, %133 : vector<8x32xi1>, vector<8x32xf32>
    %cst_39 = arith.constant dense<0.000000e+00> : vector<8x128xf32>
    %135 = tpu.matmul %131, %2, %cst_39 {dimension_numbers = #tpu.dot_dimension_numbers<[1], [0], [0], [1], [0, 0, 1, 1], [], []>} : vector<8x32xf32>, vector<32x128xf32>, vector<8x128xf32> -> vector<8x128xf32>
    %136 = arith.addf %86, %135 : vector<8x128xf32>
    %137 = vector.extract_strided_slice %136 {offsets = [0, 0], sizes = [8, 96], strides = [1, 1]} : vector<8x128xf32> to vector<8x96xf32>
    %138 = arith.negf %137 : vector<8x96xf32>
    %139 = math.exp %138 : vector<8x96xf32>
    %cst_40 = arith.constant 1.000000e+00 : f32
    %140 = vector.broadcast %cst_40 : f32 to vector<8x96xf32>
    %141 = arith.addf %140, %139 : vector<8x96xf32>
    %142 = arith.divf %140, %141 : vector<8x96xf32>
    %143 = vector.extract_strided_slice %136 {offsets = [0, 96], sizes = [8, 32], strides = [1, 1]} : vector<8x128xf32> to vector<8x32xf32>
    %144 = math.tanh %143 : vector<8x32xf32>
    %145 = vector.extract_strided_slice %142 {offsets = [0, 32], sizes = [8, 32], strides = [1, 1]} : vector<8x96xf32> to vector<8x32xf32>
    %146 = arith.mulf %145, %132 : vector<8x32xf32>
    %147 = vector.extract_strided_slice %142 {offsets = [0, 0], sizes = [8, 32], strides = [1, 1]} : vector<8x96xf32> to vector<8x32xf32>
    %148 = arith.mulf %147, %144 : vector<8x32xf32>
    %149 = arith.addf %146, %148 : vector<8x32xf32>
    %150 = vector.extract_strided_slice %142 {offsets = [0, 64], sizes = [8, 32], strides = [1, 1]} : vector<8x96xf32> to vector<8x32xf32>
    %151 = math.tanh %149 : vector<8x32xf32>
    %152 = arith.mulf %150, %151 : vector<8x32xf32>
    %153 = arith.select %60, %152, %131 : vector<8x32xi1>, vector<8x32xf32>
    %154 = arith.select %60, %149, %132 : vector<8x32xi1>, vector<8x32xf32>
    %cst_41 = arith.constant 0.000000e+00 : f32
    %155 = vector.broadcast %cst_41 : f32 to vector<8x32xf32>
    %156 = arith.select %60, %152, %155 : vector<8x32xi1>, vector<8x32xf32>
    %cst_42 = arith.constant dense<0.000000e+00> : vector<8x128xf32>
    %157 = tpu.matmul %153, %2, %cst_42 {dimension_numbers = #tpu.dot_dimension_numbers<[1], [0], [0], [1], [0, 0, 1, 1], [], []>} : vector<8x32xf32>, vector<32x128xf32>, vector<8x128xf32> -> vector<8x128xf32>
    %158 = arith.addf %87, %157 : vector<8x128xf32>
    %159 = vector.extract_strided_slice %158 {offsets = [0, 0], sizes = [8, 96], strides = [1, 1]} : vector<8x128xf32> to vector<8x96xf32>
    %160 = arith.negf %159 : vector<8x96xf32>
    %161 = math.exp %160 : vector<8x96xf32>
    %cst_43 = arith.constant 1.000000e+00 : f32
    %162 = vector.broadcast %cst_43 : f32 to vector<8x96xf32>
    %163 = arith.addf %162, %161 : vector<8x96xf32>
    %164 = arith.divf %162, %163 : vector<8x96xf32>
    %165 = vector.extract_strided_slice %158 {offsets = [0, 96], sizes = [8, 32], strides = [1, 1]} : vector<8x128xf32> to vector<8x32xf32>
    %166 = math.tanh %165 : vector<8x32xf32>
    %167 = vector.extract_strided_slice %164 {offsets = [0, 32], sizes = [8, 32], strides = [1, 1]} : vector<8x96xf32> to vector<8x32xf32>
    %168 = arith.mulf %167, %154 : vector<8x32xf32>
    %169 = vector.extract_strided_slice %164 {offsets = [0, 0], sizes = [8, 32], strides = [1, 1]} : vector<8x96xf32> to vector<8x32xf32>
    %170 = arith.mulf %169, %166 : vector<8x32xf32>
    %171 = arith.addf %168, %170 : vector<8x32xf32>
    %172 = vector.extract_strided_slice %164 {offsets = [0, 64], sizes = [8, 32], strides = [1, 1]} : vector<8x96xf32> to vector<8x32xf32>
    %173 = math.tanh %171 : vector<8x32xf32>
    %174 = arith.mulf %172, %173 : vector<8x32xf32>
    %175 = arith.select %67, %174, %153 : vector<8x32xi1>, vector<8x32xf32>
    %176 = arith.select %67, %171, %154 : vector<8x32xi1>, vector<8x32xf32>
    %cst_44 = arith.constant 0.000000e+00 : f32
    %177 = vector.broadcast %cst_44 : f32 to vector<8x32xf32>
    %178 = arith.select %67, %174, %177 : vector<8x32xi1>, vector<8x32xf32>
    %cst_45 = arith.constant dense<0.000000e+00> : vector<8x128xf32>
    %179 = tpu.matmul %175, %2, %cst_45 {dimension_numbers = #tpu.dot_dimension_numbers<[1], [0], [0], [1], [0, 0, 1, 1], [], []>} : vector<8x32xf32>, vector<32x128xf32>, vector<8x128xf32> -> vector<8x128xf32>
    %180 = arith.addf %88, %179 : vector<8x128xf32>
    %181 = vector.extract_strided_slice %180 {offsets = [0, 0], sizes = [8, 96], strides = [1, 1]} : vector<8x128xf32> to vector<8x96xf32>
    %182 = arith.negf %181 : vector<8x96xf32>
    %183 = math.exp %182 : vector<8x96xf32>
    %cst_46 = arith.constant 1.000000e+00 : f32
    %184 = vector.broadcast %cst_46 : f32 to vector<8x96xf32>
    %185 = arith.addf %184, %183 : vector<8x96xf32>
    %186 = arith.divf %184, %185 : vector<8x96xf32>
    %187 = vector.extract_strided_slice %180 {offsets = [0, 96], sizes = [8, 32], strides = [1, 1]} : vector<8x128xf32> to vector<8x32xf32>
    %188 = math.tanh %187 : vector<8x32xf32>
    %189 = vector.extract_strided_slice %186 {offsets = [0, 32], sizes = [8, 32], strides = [1, 1]} : vector<8x96xf32> to vector<8x32xf32>
    %190 = arith.mulf %189, %176 : vector<8x32xf32>
    %191 = vector.extract_strided_slice %186 {offsets = [0, 0], sizes = [8, 32], strides = [1, 1]} : vector<8x96xf32> to vector<8x32xf32>
    %192 = arith.mulf %191, %188 : vector<8x32xf32>
    %193 = arith.addf %190, %192 : vector<8x32xf32>
    %194 = vector.extract_strided_slice %186 {offsets = [0, 64], sizes = [8, 32], strides = [1, 1]} : vector<8x96xf32> to vector<8x32xf32>
    %195 = math.tanh %193 : vector<8x32xf32>
    %196 = arith.mulf %194, %195 : vector<8x32xf32>
    %cst_47 = arith.constant 0.000000e+00 : f32
    %197 = vector.broadcast %cst_47 : f32 to vector<8x32xf32>
    %198 = arith.select %74, %196, %197 : vector<8x32xi1>, vector<8x32xf32>
    %199 = arith.select %9, %112, %198 : vector<8x32xi1>, vector<8x32xf32>
    %200 = arith.select %9, %134, %178 : vector<8x32xi1>, vector<8x32xf32>
    %201 = arith.select %9, %156, %156 : vector<8x32xi1>, vector<8x32xf32>
    %202 = arith.select %9, %178, %134 : vector<8x32xi1>, vector<8x32xf32>
    %203 = arith.select %9, %198, %112 : vector<8x32xi1>, vector<8x32xf32>
    %204 = tpu.concatenate %199, %200, %201, %202, %203 in 0 : vector<8x32xf32>, vector<8x32xf32>, vector<8x32xf32>, vector<8x32xf32>, vector<8x32xf32> -> vector<40x32xf32>
    %cst_48 = arith.constant dense<0.000000e+00> : vector<40x128xf32>
    %205 = tpu.matmul %204, %3, %cst_48 {dimension_numbers = #tpu.dot_dimension_numbers<[1], [0], [0], [1], [0, 0, 1, 1], [], []>} : vector<40x32xf32>, vector<32x128xf32>, vector<40x128xf32> -> vector<40x128xf32>
    %206 = vector.broadcast %4 : vector<1x128xf32> to vector<40x128xf32>
    %207 = arith.addf %205, %206 : vector<40x128xf32>
    %208 = vector.extract_strided_slice %207 {offsets = [0, 0], sizes = [8, 128], strides = [1, 1]} : vector<40x128xf32> to vector<8x128xf32>
    %209 = vector.extract_strided_slice %207 {offsets = [8, 0], sizes = [8, 128], strides = [1, 1]} : vector<40x128xf32> to vector<8x128xf32>
    %210 = vector.extract_strided_slice %207 {offsets = [16, 0], sizes = [8, 128], strides = [1, 1]} : vector<40x128xf32> to vector<8x128xf32>
    %211 = vector.extract_strided_slice %207 {offsets = [24, 0], sizes = [8, 128], strides = [1, 1]} : vector<40x128xf32> to vector<8x128xf32>
    %212 = vector.extract_strided_slice %207 {offsets = [32, 0], sizes = [8, 128], strides = [1, 1]} : vector<40x128xf32> to vector<8x128xf32>
    %213 = arith.select %13, %208, %212 : vector<8x128xi1>, vector<8x128xf32>
    %214 = arith.select %13, %209, %211 : vector<8x128xi1>, vector<8x128xf32>
    %215 = arith.select %13, %210, %210 : vector<8x128xi1>, vector<8x128xf32>
    %216 = arith.select %13, %211, %209 : vector<8x128xi1>, vector<8x128xf32>
    %217 = arith.select %13, %212, %208 : vector<8x128xi1>, vector<8x128xf32>
    %cst_49 = arith.constant 0.000000e+00 : f32
    %218 = vector.broadcast %cst_49 : f32 to vector<8x32xf32>
    %cst_50 = arith.constant 0.000000e+00 : f32
    %219 = vector.broadcast %cst_50 : f32 to vector<8x32xf32>
    %cst_51 = arith.constant dense<0.000000e+00> : vector<8x128xf32>
    %220 = tpu.matmul %218, %5, %cst_51 {dimension_numbers = #tpu.dot_dimension_numbers<[1], [0], [0], [1], [0, 0, 1, 1], [], []>} : vector<8x32xf32>, vector<32x128xf32>, vector<8x128xf32> -> vector<8x128xf32>
    %221 = arith.addf %213, %220 : vector<8x128xf32>
    %222 = vector.extract_strided_slice %221 {offsets = [0, 0], sizes = [8, 96], strides = [1, 1]} : vector<8x128xf32> to vector<8x96xf32>
    %223 = arith.negf %222 : vector<8x96xf32>
    %224 = math.exp %223 : vector<8x96xf32>
    %cst_52 = arith.constant 1.000000e+00 : f32
    %225 = vector.broadcast %cst_52 : f32 to vector<8x96xf32>
    %226 = arith.addf %225, %224 : vector<8x96xf32>
    %227 = arith.divf %225, %226 : vector<8x96xf32>
    %228 = vector.extract_strided_slice %221 {offsets = [0, 96], sizes = [8, 32], strides = [1, 1]} : vector<8x128xf32> to vector<8x32xf32>
    %229 = math.tanh %228 : vector<8x32xf32>
    %230 = vector.extract_strided_slice %227 {offsets = [0, 32], sizes = [8, 32], strides = [1, 1]} : vector<8x96xf32> to vector<8x32xf32>
    %231 = arith.mulf %230, %219 : vector<8x32xf32>
    %232 = vector.extract_strided_slice %227 {offsets = [0, 0], sizes = [8, 32], strides = [1, 1]} : vector<8x96xf32> to vector<8x32xf32>
    %233 = arith.mulf %232, %229 : vector<8x32xf32>
    %234 = arith.addf %231, %233 : vector<8x32xf32>
    %235 = vector.extract_strided_slice %227 {offsets = [0, 64], sizes = [8, 32], strides = [1, 1]} : vector<8x96xf32> to vector<8x32xf32>
    %236 = math.tanh %234 : vector<8x32xf32>
    %237 = arith.mulf %235, %236 : vector<8x32xf32>
    %238 = arith.select %46, %237, %218 : vector<8x32xi1>, vector<8x32xf32>
    %239 = arith.select %46, %234, %219 : vector<8x32xi1>, vector<8x32xf32>
    %cst_53 = arith.constant 0.000000e+00 : f32
    %240 = vector.broadcast %cst_53 : f32 to vector<8x32xf32>
    %241 = arith.select %46, %237, %240 : vector<8x32xi1>, vector<8x32xf32>
    %cst_54 = arith.constant dense<0.000000e+00> : vector<8x128xf32>
    %242 = tpu.matmul %238, %5, %cst_54 {dimension_numbers = #tpu.dot_dimension_numbers<[1], [0], [0], [1], [0, 0, 1, 1], [], []>} : vector<8x32xf32>, vector<32x128xf32>, vector<8x128xf32> -> vector<8x128xf32>
    %243 = arith.addf %214, %242 : vector<8x128xf32>
    %244 = vector.extract_strided_slice %243 {offsets = [0, 0], sizes = [8, 96], strides = [1, 1]} : vector<8x128xf32> to vector<8x96xf32>
    %245 = arith.negf %244 : vector<8x96xf32>
    %246 = math.exp %245 : vector<8x96xf32>
    %cst_55 = arith.constant 1.000000e+00 : f32
    %247 = vector.broadcast %cst_55 : f32 to vector<8x96xf32>
    %248 = arith.addf %247, %246 : vector<8x96xf32>
    %249 = arith.divf %247, %248 : vector<8x96xf32>
    %250 = vector.extract_strided_slice %243 {offsets = [0, 96], sizes = [8, 32], strides = [1, 1]} : vector<8x128xf32> to vector<8x32xf32>
    %251 = math.tanh %250 : vector<8x32xf32>
    %252 = vector.extract_strided_slice %249 {offsets = [0, 32], sizes = [8, 32], strides = [1, 1]} : vector<8x96xf32> to vector<8x32xf32>
    %253 = arith.mulf %252, %239 : vector<8x32xf32>
    %254 = vector.extract_strided_slice %249 {offsets = [0, 0], sizes = [8, 32], strides = [1, 1]} : vector<8x96xf32> to vector<8x32xf32>
    %255 = arith.mulf %254, %251 : vector<8x32xf32>
    %256 = arith.addf %253, %255 : vector<8x32xf32>
    %257 = vector.extract_strided_slice %249 {offsets = [0, 64], sizes = [8, 32], strides = [1, 1]} : vector<8x96xf32> to vector<8x32xf32>
    %258 = math.tanh %256 : vector<8x32xf32>
    %259 = arith.mulf %257, %258 : vector<8x32xf32>
    %260 = arith.select %53, %259, %238 : vector<8x32xi1>, vector<8x32xf32>
    %261 = arith.select %53, %256, %239 : vector<8x32xi1>, vector<8x32xf32>
    %cst_56 = arith.constant 0.000000e+00 : f32
    %262 = vector.broadcast %cst_56 : f32 to vector<8x32xf32>
    %263 = arith.select %53, %259, %262 : vector<8x32xi1>, vector<8x32xf32>
    %cst_57 = arith.constant dense<0.000000e+00> : vector<8x128xf32>
    %264 = tpu.matmul %260, %5, %cst_57 {dimension_numbers = #tpu.dot_dimension_numbers<[1], [0], [0], [1], [0, 0, 1, 1], [], []>} : vector<8x32xf32>, vector<32x128xf32>, vector<8x128xf32> -> vector<8x128xf32>
    %265 = arith.addf %215, %264 : vector<8x128xf32>
    %266 = vector.extract_strided_slice %265 {offsets = [0, 0], sizes = [8, 96], strides = [1, 1]} : vector<8x128xf32> to vector<8x96xf32>
    %267 = arith.negf %266 : vector<8x96xf32>
    %268 = math.exp %267 : vector<8x96xf32>
    %cst_58 = arith.constant 1.000000e+00 : f32
    %269 = vector.broadcast %cst_58 : f32 to vector<8x96xf32>
    %270 = arith.addf %269, %268 : vector<8x96xf32>
    %271 = arith.divf %269, %270 : vector<8x96xf32>
    %272 = vector.extract_strided_slice %265 {offsets = [0, 96], sizes = [8, 32], strides = [1, 1]} : vector<8x128xf32> to vector<8x32xf32>
    %273 = math.tanh %272 : vector<8x32xf32>
    %274 = vector.extract_strided_slice %271 {offsets = [0, 32], sizes = [8, 32], strides = [1, 1]} : vector<8x96xf32> to vector<8x32xf32>
    %275 = arith.mulf %274, %261 : vector<8x32xf32>
    %276 = vector.extract_strided_slice %271 {offsets = [0, 0], sizes = [8, 32], strides = [1, 1]} : vector<8x96xf32> to vector<8x32xf32>
    %277 = arith.mulf %276, %273 : vector<8x32xf32>
    %278 = arith.addf %275, %277 : vector<8x32xf32>
    %279 = vector.extract_strided_slice %271 {offsets = [0, 64], sizes = [8, 32], strides = [1, 1]} : vector<8x96xf32> to vector<8x32xf32>
    %280 = math.tanh %278 : vector<8x32xf32>
    %281 = arith.mulf %279, %280 : vector<8x32xf32>
    %282 = arith.select %60, %281, %260 : vector<8x32xi1>, vector<8x32xf32>
    %283 = arith.select %60, %278, %261 : vector<8x32xi1>, vector<8x32xf32>
    %cst_59 = arith.constant 0.000000e+00 : f32
    %284 = vector.broadcast %cst_59 : f32 to vector<8x32xf32>
    %285 = arith.select %60, %281, %284 : vector<8x32xi1>, vector<8x32xf32>
    %cst_60 = arith.constant dense<0.000000e+00> : vector<8x128xf32>
    %286 = tpu.matmul %282, %5, %cst_60 {dimension_numbers = #tpu.dot_dimension_numbers<[1], [0], [0], [1], [0, 0, 1, 1], [], []>} : vector<8x32xf32>, vector<32x128xf32>, vector<8x128xf32> -> vector<8x128xf32>
    %287 = arith.addf %216, %286 : vector<8x128xf32>
    %288 = vector.extract_strided_slice %287 {offsets = [0, 0], sizes = [8, 96], strides = [1, 1]} : vector<8x128xf32> to vector<8x96xf32>
    %289 = arith.negf %288 : vector<8x96xf32>
    %290 = math.exp %289 : vector<8x96xf32>
    %cst_61 = arith.constant 1.000000e+00 : f32
    %291 = vector.broadcast %cst_61 : f32 to vector<8x96xf32>
    %292 = arith.addf %291, %290 : vector<8x96xf32>
    %293 = arith.divf %291, %292 : vector<8x96xf32>
    %294 = vector.extract_strided_slice %287 {offsets = [0, 96], sizes = [8, 32], strides = [1, 1]} : vector<8x128xf32> to vector<8x32xf32>
    %295 = math.tanh %294 : vector<8x32xf32>
    %296 = vector.extract_strided_slice %293 {offsets = [0, 32], sizes = [8, 32], strides = [1, 1]} : vector<8x96xf32> to vector<8x32xf32>
    %297 = arith.mulf %296, %283 : vector<8x32xf32>
    %298 = vector.extract_strided_slice %293 {offsets = [0, 0], sizes = [8, 32], strides = [1, 1]} : vector<8x96xf32> to vector<8x32xf32>
    %299 = arith.mulf %298, %295 : vector<8x32xf32>
    %300 = arith.addf %297, %299 : vector<8x32xf32>
    %301 = vector.extract_strided_slice %293 {offsets = [0, 64], sizes = [8, 32], strides = [1, 1]} : vector<8x96xf32> to vector<8x32xf32>
    %302 = math.tanh %300 : vector<8x32xf32>
    %303 = arith.mulf %301, %302 : vector<8x32xf32>
    %304 = arith.select %67, %303, %282 : vector<8x32xi1>, vector<8x32xf32>
    %305 = arith.select %67, %300, %283 : vector<8x32xi1>, vector<8x32xf32>
    %cst_62 = arith.constant 0.000000e+00 : f32
    %306 = vector.broadcast %cst_62 : f32 to vector<8x32xf32>
    %307 = arith.select %67, %303, %306 : vector<8x32xi1>, vector<8x32xf32>
    %cst_63 = arith.constant dense<0.000000e+00> : vector<8x128xf32>
    %308 = tpu.matmul %304, %5, %cst_63 {dimension_numbers = #tpu.dot_dimension_numbers<[1], [0], [0], [1], [0, 0, 1, 1], [], []>} : vector<8x32xf32>, vector<32x128xf32>, vector<8x128xf32> -> vector<8x128xf32>
    %309 = arith.addf %217, %308 : vector<8x128xf32>
    %310 = vector.extract_strided_slice %309 {offsets = [0, 0], sizes = [8, 96], strides = [1, 1]} : vector<8x128xf32> to vector<8x96xf32>
    %311 = arith.negf %310 : vector<8x96xf32>
    %312 = math.exp %311 : vector<8x96xf32>
    %cst_64 = arith.constant 1.000000e+00 : f32
    %313 = vector.broadcast %cst_64 : f32 to vector<8x96xf32>
    %314 = arith.addf %313, %312 : vector<8x96xf32>
    %315 = arith.divf %313, %314 : vector<8x96xf32>
    %316 = vector.extract_strided_slice %309 {offsets = [0, 96], sizes = [8, 32], strides = [1, 1]} : vector<8x128xf32> to vector<8x32xf32>
    %317 = math.tanh %316 : vector<8x32xf32>
    %318 = vector.extract_strided_slice %315 {offsets = [0, 32], sizes = [8, 32], strides = [1, 1]} : vector<8x96xf32> to vector<8x32xf32>
    %319 = arith.mulf %318, %305 : vector<8x32xf32>
    %320 = vector.extract_strided_slice %315 {offsets = [0, 0], sizes = [8, 32], strides = [1, 1]} : vector<8x96xf32> to vector<8x32xf32>
    %321 = arith.mulf %320, %317 : vector<8x32xf32>
    %322 = arith.addf %319, %321 : vector<8x32xf32>
    %323 = vector.extract_strided_slice %315 {offsets = [0, 64], sizes = [8, 32], strides = [1, 1]} : vector<8x96xf32> to vector<8x32xf32>
    %324 = math.tanh %322 : vector<8x32xf32>
    %325 = arith.mulf %323, %324 : vector<8x32xf32>
    %cst_65 = arith.constant 0.000000e+00 : f32
    %326 = vector.broadcast %cst_65 : f32 to vector<8x32xf32>
    %327 = arith.select %74, %325, %326 : vector<8x32xi1>, vector<8x32xf32>
    %328 = arith.select %9, %241, %327 : vector<8x32xi1>, vector<8x32xf32>
    %329 = arith.select %9, %263, %307 : vector<8x32xi1>, vector<8x32xf32>
    %330 = arith.select %9, %285, %285 : vector<8x32xi1>, vector<8x32xf32>
    %331 = arith.select %9, %307, %263 : vector<8x32xi1>, vector<8x32xf32>
    %332 = arith.select %9, %327, %241 : vector<8x32xi1>, vector<8x32xf32>
    %333 = tpu.concatenate %328, %329, %330, %331, %332 in 0 : vector<8x32xf32>, vector<8x32xf32>, vector<8x32xf32>, vector<8x32xf32>, vector<8x32xf32> -> vector<40x32xf32>
    %334 = tpu.concatenate %204, %333 in 1 : vector<40x32xf32>, vector<40x32xf32> -> vector<40x64xf32>
    %c0_66 = arith.constant 0 : index
    %c0_67 = arith.constant 0 : index
    %335 = vector.load %arg3[%c0_66, %c0_67] : memref<40x64xf32, #tpu.memory_space<vmem>>, vector<40x64xf32>
    tpu.vector_store %arg3[%c0_66, %c0_67], %334 {strides = array<i32>} : memref<40x64xf32, #tpu.memory_space<vmem>>, vector<40x64xf32>,
    return
  }
}

</mosaic_0001>

<llo_original>
// kernel: evolution_forward.1
$region0: #{evolution_forward.1}
  #allocation0 [shape = 'u32[]', space=smem, size = 0x4, offset = 0x4, fixed_abs, tag = 'smem constant byte address 0x4 - core index']
  #allocation1 [shape = 'u32[72,128]{1,0:T(1,128)}', space=vmem, size = 0x9000, scoped, tag = 'internal scratch']
  %s0 = inlined_call_operand.vmem [shape: f32[40,16], index: 0, kind: input, shape index: {}]
  %s1 = inlined_call_operand.vmem [shape: f32[8,1], index: 1, kind: input, shape index: {}]
  %s2 = inlined_call_operand.vmem [shape: f32[128,128], index: 2, kind: input, shape index: {}]
  %s3 = inlined_call_operand.vmem [shape: f32[40,64], index: 3, kind: output, shape index: {}]
  %s4 = sld [smem:[#allocation0]]
  $region22: #{evolution_forward.1} parent=0
    _
  %s6 = ssub.s32 1, %s4
  %s7 = scalar_select 0, %s6, %s4
  // Predicated region
  $region2: #{evolution_forward.1} parent=0 // pred_check
    _
  $region3: #{evolution_forward.1} parent=0 // pred_check_branch
    %9 = sbr.rel (0) target = $region5
  $region4: #{evolution_forward.1} parent=0 // pred_region
    _
  $region5: #{evolution_forward.1} parent=0 // pred_fallthru
    _
  // Predicated region
  $region6: #{evolution_forward.1} parent=0 // pred_check
    _
  $region7: #{evolution_forward.1} parent=0 // pred_check_branch
    %11 = sbr.rel (0) target = $region9
  $region8: #{evolution_forward.1} parent=0 // pred_region
    _
  $region9: #{evolution_forward.1} parent=0 // pred_fallthru
    _
  // Predicated region
  $region10: #{evolution_forward.1} parent=0 // pred_check
    _
  $region11: #{evolution_forward.1} parent=0 // pred_check_branch
    %13 = sbr.rel (0) target = $region13
  $region12: #{evolution_forward.1} parent=0 // pred_region
    _
  $region13: #{evolution_forward.1} parent=0 // pred_fallthru
    _
  %v14 = vld [vmem:[%s2] sm:$0xff]
  %v15 = vld [vmem:[%s2 + $0x8] sm:$0xff]
  %v16 = vld [vmem:[%s2 + $0x10] sm:$0x1]
  %v17 = vld [vmem:[%s2 + $0x18] sm:$0xff]
  %v18 = vld [vmem:[%s2 + $0x20] sm:$0xff]
  %v19 = vld [vmem:[%s2 + $0x28] sm:$0xff]
  %v20 = vld [vmem:[%s2 + $0x30] sm:$0xff]
  %v21 = vld [vmem:[%s2 + $0x38] sm:$0xff]
  %v22 = vld [vmem:[%s2 + $0x40] sm:$0xff]
  %v23 = vld [vmem:[%s2 + $0x48] sm:$0xff]
  %v24 = vld [vmem:[%s2 + $0x50] sm:$0xff]
  %v25 = vld [vmem:[%s2 + $0x58] sm:$0x1]
  %v26 = vld [vmem:[%s2 + $0x60] sm:$0xff]
  %v27 = vld [vmem:[%s2 + $0x68] sm:$0xff]
  %v28 = vld [vmem:[%s2 + $0x70] sm:$0xff]
  %v29 = vld [vmem:[%s2 + $0x78] sm:$0xff]
  %v30 = vlaneseq
  %v31 = vand.u32 %v30, 127
  %vm32 = vcmp.lt.s32.totalorder %v31, 16
  %v33 = vand.u32 %v31, 31
  %vm34 = vcmp.lt.s32.totalorder %v33, 16
  %v35 = vld [vmem:[%s1] sm:$0xff]
  %vm36 = vcmp.gt.f32.partialorder %v35, 0.0
  %v37 = vsel %vm36, 1.0, 0.0
  %vm38 = vcmp.gt.f32.partialorder %v35, 1.0
  %v39 = vsel %vm38, 1.0, 0.0
  %vm40 = vcmp.gt.f32.partialorder %v35, 2.0
  %v41 = vsel %vm40, 1.0, 0.0
  %vm42 = vcmp.gt.f32.partialorder %v35, 3.0
  %v43 = vsel %vm42, 1.0, 0.0
  %vm44 = vcmp.gt.f32.partialorder %v35, 4.0
  %v45 = vsel %vm44, 1.0, 0.0
  %47 = vset.pattern.permute.xlu0 0
  %48 = vperm.xlu0 %47, %v37
  %v49 = vpop.permute.xlu0 %48
  %52 = vset.pattern.permute.xlu0 0
  %53 = vperm.xlu0 %52, %v45
  %v54 = vpop.permute.xlu0 %53
  %v56 = vsel %vm32, %v49, %v54
  %vm57 = vcmp.gt.f32.partialorder %v56, 0.5
  %59 = vset.pattern.permute.xlu0 0
  %60 = vperm.xlu0 %59, %v39
  %v61 = vpop.permute.xlu0 %60
  %64 = vset.pattern.permute.xlu0 0
  %65 = vperm.xlu0 %64, %v43
  %v66 = vpop.permute.xlu0 %65
  %v68 = vsel %vm32, %v61, %v66
  %vm69 = vcmp.gt.f32.partialorder %v68, 0.5
  %71 = vset.pattern.permute.xlu0 0
  %72 = vperm.xlu0 %71, %v41
  %v73 = vpop.permute.xlu0 %72
  %vm75 = vcmp.gt.f32.partialorder %v73, 0.5
  %v76 = vsel %vm32, %v66, %v61
  %vm77 = vcmp.gt.f32.partialorder %v76, 0.5
  %v78 = vsel %vm32, %v54, %v49
  %vm79 = vcmp.gt.f32.partialorder %v78, 0.5
  %v80 = vld [vmem:[%s0] sm:$0xff]
  %v81 = vld [vmem:[%s0 + $0x8] sm:$0xff]
  %v82 = vld [vmem:[%s0 + $0x10] sm:$0xff]
  %v83 = vld [vmem:[%s0 + $0x18] sm:$0xff]
  %v84 = vld [vmem:[%s0 + $0x20] sm:$0xff]
  %v85 = vperm.slane %v16, 0
  %vm86 = vcmask 130048
  %v88 = vsel %vm86, %v80, 0
  %v91 = vsel %vm86, %v81, 0
  %v94 = vsel %vm86, %v82, 0
  %v97 = vsel %vm86, %v83, 0
  %v100 = vsel %vm86, %v84, 0
  %102 = vmatpush.msra.mxu0 0.0
  %103 = vmatpush.msra.mxu0 0.0
  %104 = vmatpush.msra.mxu0 0.0
  %105 = vmatpush.msra.mxu0 0.0
  %106 = vmatpush.msra.mxu0 0.0
  %107 = vmatpush.msra.mxu0 0.0
  %108 = vmatpush.msra.mxu0 0.0
  %109 = vmatpush.msra.mxu0 0.0
  %110 = vmatpush.msra.mxu0 0.0
  %111 = vmatpush.msra.mxu0 0.0
  %112 = vmatpush.msra.mxu0 0.0
  %113 = vmatpush.msra.mxu0 0.0
  %114 = vmatpush.msra.mxu0 0.0
  %115 = vmatpush.msra.mxu0 0.0
  %116 = vmatpush.msra.mxu0 %v15
  %117 = vmatpush.msra.mxu0 %v14
  %118 = vmatmul.f32.gmra.mxu0 %v88
  %v119 = vpop.f32.mrf.mxu0
  %v120 = vadd.f32 %v85, %v119
  %121 = vmatmul.f32.gmra.mxu0 %v91
  %v122 = vpop.f32.mrf.mxu0
  %v123 = vadd.f32 %v85, %v122
  %124 = vmatmul.f32.gmra.mxu0 %v94
  %v125 = vpop.f32.mrf.mxu0
  %v126 = vadd.f32 %v85, %v125
  %127 = vmatmul.f32.gmra.mxu0 %v97
  %v128 = vpop.f32.mrf.mxu0
  %v129 = vadd.f32 %v85, %v128
  %130 = vmatmul.f32.gmra.mxu0 %v100
  %v131 = vpop.f32.mrf.mxu0
  %v132 = vadd.f32 %v85, %v131
  %133 = vdwg.mxu0
  %v134 = vsel %vm34, %v120, %v132
  %v135 = vsel %vm34, %v123, %v129
  %v136 = vsel %vm34, %v129, %v123
  %v137 = vsel %vm34, %v132, %v120
  %vm138 = vcmask 261120
  %v140 = vsel %vm138, 0.0, 0
  %142 = vmatpush.msra.mxu0 0.0
  %143 = vmatpush.msra.mxu0 0.0
  %144 = vmatpush.msra.mxu0 0.0
  %145 = vmatpush.msra.mxu0 0.0
  %146 = vmatpush.msra.mxu0 0.0
  %147 = vmatpush.msra.mxu0 0.0
  %148 = vmatpush.msra.mxu0 0.0
  %149 = vmatpush.msra.mxu0 0.0
  %150 = vmatpush.msra.mxu0 0.0
  %151 = vmatpush.msra.mxu0 0.0
  %152 = vmatpush.msra.mxu0 0.0
  %153 = vmatpush.msra.mxu0 0.0
  %154 = vmatpush.msra.mxu0 %v20
  %155 = vmatpush.msra.mxu0 %v19
  %156 = vmatpush.msra.mxu0 %v18
  %157 = vmatpush.msra.mxu0 %v17
  %158 = vmatmul.f32.gmra.mxu0 %v140
  %v159 = vpop.f32.mrf.mxu0
  %v160 = vadd.f32 0.0, %v159
  %161 = vdwg.mxu0
  %v162 = vadd.f32 %v134, %v160
  %v163 = vxor.u32 %v162, 2147483648
  %v164 = vmul.f32 %v163, 1.442695
  %v165 = vpow.pop %v164
  %v166 = vadd.f32 %v165, 1.0
  %v167 = vrcp.pop %v166
  %v168 = vmul.f32 %v166, %v167
  %v169 = vsub.f32 1.0, %v168
  %v170 = vmul.f32 %v167, %v169
  %v171 = vadd.f32 %v167, %v170
  %vm172 = vweird.f32 %v166
  %vm173 = vweird.f32 %v167
  %vm174 = vmor %vm172, %vm173
  %v175 = vsel %vm174, %v167, %v171
  %v176 = vand.u32 2147483647, %v166
  %vm177 = vcmp.eq.f32.partialorder %v176, 8.507059e+37
  %v178 = vand.u32 %v166, 2147483648
  %v179 = vor.u32 1.1754944e-38, %v178
  %v180 = vsel %vm177, %v179, %v175
  %v181 = vmul.f32 1.0, %v180
  %v182 = vtanh.pop %v162
  %v183 = vmul.f32 %v181, 0.0
  %185 = vrot.lane.b32.xlu0 %v182, 32
  %v186 = vpop.permute.xlu0 %185
  %v188 = vmul.f32 %v181, %v186
  %190 = vrot.lane.b32.xlu0 %v188, 32
  %v191 = vpop.permute.xlu0 %190
  %v193 = vadd.f32 %v183, %v191
  %v194 = vtanh.pop %v193
  %196 = vrot.lane.b32.xlu0 %v194, 32
  %v197 = vpop.permute.xlu0 %196
  %v199 = vmul.f32 %v181, %v197
  %201 = vrot.lane.b32.xlu0 %v199, 64
  %v202 = vpop.permute.xlu0 %201
  %v204 = vsel %vm57, %v202, 0.0
  %206 = vrot.lane.b32.xlu0 %v193, 96
  %v207 = vpop.permute.xlu0 %206
  %v209 = vsel %vm57, %v207, 0.0
  %v211 = vsel %vm138, %v204, 0
  %213 = vmatpush.msra.mxu0 0.0
  %214 = vmatpush.msra.mxu0 0.0
  %215 = vmatpush.msra.mxu0 0.0
  %216 = vmatpush.msra.mxu0 0.0
  %217 = vmatpush.msra.mxu0 0.0
  %218 = vmatpush.msra.mxu0 0.0
  %219 = vmatpush.msra.mxu0 0.0
  %220 = vmatpush.msra.mxu0 0.0
  %221 = vmatpush.msra.mxu0 0.0
  %222 = vmatpush.msra.mxu0 0.0
  %223 = vmatpush.msra.mxu0 0.0
  %224 = vmatpush.msra.mxu0 0.0
  %225 = vmatpush.msra.mxu0 %v20
  %226 = vmatpush.msra.mxu0 %v19
  %227 = vmatpush.msra.mxu0 %v18
  %228 = vmatpush.msra.mxu0 %v17
  %229 = vmatmul.f32.gmra.mxu0 %v211
  %v230 = vpop.f32.mrf.mxu0
  %v231 = vadd.f32 0.0, %v230
  %232 = vdwg.mxu0
  %v233 = vadd.f32 %v135, %v231
  %v234 = vxor.u32 %v233, 2147483648
  %v235 = vmul.f32 %v234, 1.442695
  %v236 = vpow.pop %v235
  %v237 = vadd.f32 %v236, 1.0
  %v238 = vrcp.pop %v237
  %v239 = vmul.f32 %v237, %v238
  %v240 = vsub.f32 1.0, %v239
  %v241 = vmul.f32 %v238, %v240
  %v242 = vadd.f32 %v238, %v241
  %vm243 = vweird.f32 %v237
  %vm244 = vweird.f32 %v238
  %vm245 = vmor %vm243, %vm244
  %v246 = vsel %vm245, %v238, %v242
  %v247 = vand.u32 2147483647, %v237
  %vm248 = vcmp.eq.f32.partialorder %v247, 8.507059e+37
  %v249 = vand.u32 %v237, 2147483648
  %v250 = vor.u32 1.1754944e-38, %v249
  %v251 = vsel %vm248, %v250, %v246
  %v252 = vmul.f32 1.0, %v251
  %v253 = vtanh.pop %v233
  %255 = vrot.lane.b32.xlu0 %v209, 32
  %v256 = vpop.permute.xlu0 %255
  %v258 = vmul.f32 %v252, %v256
  %260 = vrot.lane.b32.xlu0 %v253, 32
  %v261 = vpop.permute.xlu0 %260
  %v263 = vmul.f32 %v252, %v261
  %265 = vrot.lane.b32.xlu0 %v263, 32
  %v266 = vpop.permute.xlu0 %265
  %v268 = vadd.f32 %v258, %v266
  %v269 = vtanh.pop %v268
  %271 = vrot.lane.b32.xlu0 %v269, 32
  %v272 = vpop.permute.xlu0 %271
  %v274 = vmul.f32 %v252, %v272
  %276 = vrot.lane.b32.xlu0 %v274, 64
  %v277 = vpop.permute.xlu0 %276
  %v279 = vsel %vm69, %v277, %v204
  %281 = vrot.lane.b32.xlu0 %v268, 96
  %v282 = vpop.permute.xlu0 %281
  %v284 = vsel %vm69, %v282, %v209
  %v285 = vsel %vm69, %v277, 0.0
  %v287 = vsel %vm138, %v279, 0
  %289 = vmatpush.msra.mxu0 0.0
  %290 = vmatpush.msra.mxu0 0.0
  %291 = vmatpush.msra.mxu0 0.0
  %292 = vmatpush.msra.mxu0 0.0
  %293 = vmatpush.msra.mxu0 0.0
  %294 = vmatpush.msra.mxu0 0.0
  %295 = vmatpush.msra.mxu0 0.0
  %296 = vmatpush.msra.mxu0 0.0
  %297 = vmatpush.msra.mxu0 0.0
  %298 = vmatpush.msra.mxu0 0.0
  %299 = vmatpush.msra.mxu0 0.0
  %300 = vmatpush.msra.mxu0 0.0
  %301 = vmatpush.msra.mxu0 %v20
  %302 = vmatpush.msra.mxu0 %v19
  %303 = vmatpush.msra.mxu0 %v18
  %304 = vmatpush.msra.mxu0 %v17
  %305 = vmatmul.f32.gmra.mxu0 %v287
  %v306 = vpop.f32.mrf.mxu0
  %v307 = vadd.f32 0.0, %v306
  %308 = vdwg.mxu0
  %v309 = vadd.f32 %v126, %v307
  %v310 = vxor.u32 %v309, 2147483648
  %v311 = vmul.f32 %v310, 1.442695
  %v312 = vpow.pop %v311
  %v313 = vadd.f32 %v312, 1.0
  %v314 = vrcp.pop %v313
  %v315 = vmul.f32 %v313, %v314
  %v316 = vsub.f32 1.0, %v315
  %v317 = vmul.f32 %v314, %v316
  %v318 = vadd.f32 %v314, %v317
  %vm319 = vweird.f32 %v313
  %vm320 = vweird.f32 %v314
  %vm321 = vmor %vm319, %vm320
  %v322 = vsel %vm321, %v314, %v318
  %v323 = vand.u32 2147483647, %v313
  %vm324 = vcmp.eq.f32.partialorder %v323, 8.507059e+37
  %v325 = vand.u32 %v313, 2147483648
  %v326 = vor.u32 1.1754944e-38, %v325
  %v327 = vsel %vm324, %v326, %v322
  %v328 = vmul.f32 1.0, %v327
  %v329 = vtanh.pop %v309
  %331 = vrot.lane.b32.xlu0 %v284, 32
  %v332 = vpop.permute.xlu0 %331
  %v334 = vmul.f32 %v328, %v332
  %336 = vrot.lane.b32.xlu0 %v329, 32
  %v337 = vpop.permute.xlu0 %336
  %v339 = vmul.f32 %v328, %v337
  %341 = vrot.lane.b32.xlu0 %v339, 32
  %v342 = vpop.permute.xlu0 %341
  %v344 = vadd.f32 %v334, %v342
  %v345 = vtanh.pop %v344
  %347 = vrot.lane.b32.xlu0 %v345, 32
  %v348 = vpop.permute.xlu0 %347
  %v350 = vmul.f32 %v328, %v348
  %351 = vrot.lane.b32.xlu0 %v279, 64
  %v352 = vpop.permute.xlu0 %351
  %v354 = vsel %vm75, %v350, %v352
  %v355 = vsel %vm75, %v344, %v332
  %v356 = vsel %vm75, %v350, 0.0
  %358 = vrot.lane.b32.xlu0 %v354, 64
  %v359 = vpop.permute.xlu0 %358
  %v360 = vsel %vm138, %v359, 0
  %362 = vmatpush.msra.mxu0 0.0
  %363 = vmatpush.msra.mxu0 0.0
  %364 = vmatpush.msra.mxu0 0.0
  %365 = vmatpush.msra.mxu0 0.0
  %366 = vmatpush.msra.mxu0 0.0
  %367 = vmatpush.msra.mxu0 0.0
  %368 = vmatpush.msra.mxu0 0.0
  %369 = vmatpush.msra.mxu0 0.0
  %370 = vmatpush.msra.mxu0 0.0
  %371 = vmatpush.msra.mxu0 0.0
  %372 = vmatpush.msra.mxu0 0.0
  %373 = vmatpush.msra.mxu0 0.0
  %374 = vmatpush.msra.mxu0 %v20
  %375 = vmatpush.msra.mxu0 %v19
  %376 = vmatpush.msra.mxu0 %v18
  %377 = vmatpush.msra.mxu0 %v17
  %378 = vmatmul.f32.gmra.mxu0 %v360
  %v379 = vpop.f32.mrf.mxu0
  %v380 = vadd.f32 0.0, %v379
  %381 = vdwg.mxu0
  %v382 = vadd.f32 %v136, %v380
  %v383 = vxor.u32 %v382, 2147483648
  %v384 = vmul.f32 %v383, 1.442695
  %v385 = vpow.pop %v384
  %v386 = vadd.f32 %v385, 1.0
  %v387 = vrcp.pop %v386
  %v388 = vmul.f32 %v386, %v387
  %v389 = vsub.f32 1.0, %v388
  %v390 = vmul.f32 %v387, %v389
  %v391 = vadd.f32 %v387, %v390
  %vm392 = vweird.f32 %v386
  %vm393 = vweird.f32 %v387
  %vm394 = vmor %vm392, %vm393
  %v395 = vsel %vm394, %v387, %v391
  %v396 = vand.u32 2147483647, %v386
  %vm397 = vcmp.eq.f32.partialorder %v396, 8.507059e+37
  %v398 = vand.u32 %v386, 2147483648
  %v399 = vor.u32 1.1754944e-38, %v398
  %v400 = vsel %vm397, %v399, %v395
  %v401 = vmul.f32 1.0, %v400
  %v402 = vtanh.pop %v382
  %v403 = vmul.f32 %v401, %v355
  %405 = vrot.lane.b32.xlu0 %v402, 32
  %v406 = vpop.permute.xlu0 %405
  %v408 = vmul.f32 %v401, %v406
  %410 = vrot.lane.b32.xlu0 %v408, 32
  %v411 = vpop.permute.xlu0 %410
  %v413 = vadd.f32 %v403, %v411
  %v414 = vtanh.pop %v413
  %416 = vrot.lane.b32.xlu0 %v414, 32
  %v417 = vpop.permute.xlu0 %416
  %v419 = vmul.f32 %v401, %v417
  %421 = vrot.lane.b32.xlu0 %v419, 64
  %v422 = vpop.permute.xlu0 %421
  %v425 = vsel %vm77, %v422, %v359
  %427 = vrot.lane.b32.xlu0 %v413, 96
  %v428 = vpop.permute.xlu0 %427
  %431 = vrot.lane.b32.xlu0 %v355, 96
  %v432 = vpop.permute.xlu0 %431
  %v434 = vsel %vm77, %v428, %v432
  %v435 = vsel %vm77, %v422, 0.0
  %v437 = vsel %vm138, %v425, 0
  %439 = vmatpush.msra.mxu0 0.0
  %440 = vmatpush.msra.mxu0 0.0
  %441 = vmatpush.msra.mxu0 0.0
  %442 = vmatpush.msra.mxu0 0.0
  %443 = vmatpush.msra.mxu0 0.0
  %444 = vmatpush.msra.mxu0 0.0
  %445 = vmatpush.msra.mxu0 0.0
  %446 = vmatpush.msra.mxu0 0.0
  %447 = vmatpush.msra.mxu0 0.0
  %448 = vmatpush.msra.mxu0 0.0
  %449 = vmatpush.msra.mxu0 0.0
  %450 = vmatpush.msra.mxu0 0.0
  %451 = vmatpush.msra.mxu0 %v20
  %452 = vmatpush.msra.mxu0 %v19
  %453 = vmatpush.msra.mxu0 %v18
  %454 = vmatpush.msra.mxu0 %v17
  %455 = vmatmul.f32.gmra.mxu0 %v437
  %v456 = vpop.f32.mrf.mxu0
  %v457 = vadd.f32 0.0, %v456
  %458 = vdwg.mxu0
  %v459 = vadd.f32 %v137, %v457
  %v460 = vxor.u32 %v459, 2147483648
  %v461 = vmul.f32 %v460, 1.442695
  %v462 = vpow.pop %v461
  %v463 = vadd.f32 %v462, 1.0
  %v464 = vrcp.pop %v463
  %v465 = vmul.f32 %v463, %v464
  %v466 = vsub.f32 1.0, %v465
  %v467 = vmul.f32 %v464, %v466
  %v468 = vadd.f32 %v464, %v467
  %vm469 = vweird.f32 %v463
  %vm470 = vweird.f32 %v464
  %vm471 = vmor %vm469, %vm470
  %v472 = vsel %vm471, %v464, %v468
  %v473 = vand.u32 2147483647, %v463
  %vm474 = vcmp.eq.f32.partialorder %v473, 8.507059e+37
  %v475 = vand.u32 %v463, 2147483648
  %v476 = vor.u32 1.1754944e-38, %v475
  %v477 = vsel %vm474, %v476, %v472
  %v478 = vmul.f32 1.0, %v477
  %v479 = vtanh.pop %v459
  %481 = vrot.lane.b32.xlu0 %v434, 32
  %v482 = vpop.permute.xlu0 %481
  %v484 = vmul.f32 %v478, %v482
  %486 = vrot.lane.b32.xlu0 %v479, 32
  %v487 = vpop.permute.xlu0 %486
  %v489 = vmul.f32 %v478, %v487
  %491 = vrot.lane.b32.xlu0 %v489, 32
  %v492 = vpop.permute.xlu0 %491
  %v494 = vadd.f32 %v484, %v492
  %v495 = vtanh.pop %v494
  %497 = vrot.lane.b32.xlu0 %v495, 32
  %v498 = vpop.permute.xlu0 %497
  %v500 = vmul.f32 %v478, %v498
  %502 = vrot.lane.b32.xlu0 %v500, 64
  %v503 = vpop.permute.xlu0 %502
  %v505 = vsel %vm79, %v503, 0.0
  %v506 = vsel %vm32, %v204, %v505
  %v507 = vsel %vm32, %v285, %v435
  %v508 = vsel %vm32, %v435, %v285
  %v509 = vsel %vm32, %v505, %v204
  %511 = vrot.lane.b32.xlu0 %v356, 64
  %v512 = vpop.permute.xlu0 %511
  %v514 = vperm.slane %v25, 0
  %v516 = vsel %vm138, %v506, 0
  %v519 = vsel %vm138, %v507, 0
  %v521 = vsel %vm138, %v512, 0
  %v524 = vsel %vm138, %v508, 0
  %v527 = vsel %vm138, %v509, 0
  %529 = vmatpush.msra.mxu0 0.0
  %530 = vmatpush.msra.mxu0 0.0
  %531 = vmatpush.msra.mxu0 0.0
  %532 = vmatpush.msra.mxu0 0.0
  %533 = vmatpush.msra.mxu0 0.0
  %534 = vmatpush.msra.mxu0 0.0
  %535 = vmatpush.msra.mxu0 0.0
  %536 = vmatpush.msra.mxu0 0.0
  %537 = vmatpush.msra.mxu0 0.0
  %538 = vmatpush.msra.mxu0 0.0
  %539 = vmatpush.msra.mxu0 0.0
  %540 = vmatpush.msra.mxu0 0.0
  %541 = vmatpush.msra.mxu0 %v24
  %542 = vmatpush.msra.mxu0 %v23
  %543 = vmatpush.msra.mxu0 %v22
  %544 = vmatpush.msra.mxu0 %v21
  %545 = vmatmul.f32.gmra.mxu0 %v516
  %v546 = vpop.f32.mrf.mxu0
  %v547 = vadd.f32 %v514, %v546
  %548 = vmatmul.f32.gmra.mxu0 %v519
  %v549 = vpop.f32.mrf.mxu0
  %v550 = vadd.f32 %v514, %v549
  %551 = vmatmul.f32.gmra.mxu0 %v521
  %v552 = vpop.f32.mrf.mxu0
  %v553 = vadd.f32 %v514, %v552
  %554 = vmatmul.f32.gmra.mxu0 %v524
  %v555 = vpop.f32.mrf.mxu0
  %v556 = vadd.f32 %v514, %v555
  %557 = vmatmul.f32.gmra.mxu0 %v527
  %v558 = vpop.f32.mrf.mxu0
  %v559 = vadd.f32 %v514, %v558
  %560 = vdwg.mxu0
  %v561 = vsel %vm34, %v547, %v559
  %v562 = vsel %vm34, %v550, %v556
  %v563 = vsel %vm34, %v556, %v550
  %v564 = vsel %vm34, %v559, %v547
  %565 = vmatpush.msra.mxu0 0.0
  %566 = vmatpush.msra.mxu0 0.0
  %567 = vmatpush.msra.mxu0 0.0
  %568 = vmatpush.msra.mxu0 0.0
  %569 = vmatpush.msra.mxu0 0.0
  %570 = vmatpush.msra.mxu0 0.0
  %571 = vmatpush.msra.mxu0 0.0
  %572 = vmatpush.msra.mxu0 0.0
  %573 = vmatpush.msra.mxu0 0.0
  %574 = vmatpush.msra.mxu0 0.0
  %575 = vmatpush.msra.mxu0 0.0
  %576 = vmatpush.msra.mxu0 0.0
  %577 = vmatpush.msra.mxu0 %v29
  %578 = vmatpush.msra.mxu0 %v28
  %579 = vmatpush.msra.mxu0 %v27
  %580 = vmatpush.msra.mxu0 %v26
  %581 = vmatmul.f32.gmra.mxu0 %v140
  %v582 = vpop.f32.mrf.mxu0
  %v583 = vadd.f32 0.0, %v582
  %584 = vdwg.mxu0
  %v585 = vadd.f32 %v561, %v583
  %v586 = vxor.u32 %v585, 2147483648
  %v587 = vmul.f32 %v586, 1.442695
  %v588 = vpow.pop %v587
  %v589 = vadd.f32 %v588, 1.0
  %v590 = vrcp.pop %v589
  %v591 = vmul.f32 %v589, %v590
  %v592 = vsub.f32 1.0, %v591
  %v593 = vmul.f32 %v590, %v592
  %v594 = vadd.f32 %v590, %v593
  %vm595 = vweird.f32 %v589
  %vm596 = vweird.f32 %v590
  %vm597 = vmor %vm595, %vm596
  %v598 = vsel %vm597, %v590, %v594
  %v599 = vand.u32 2147483647, %v589
  %vm600 = vcmp.eq.f32.partialorder %v599, 8.507059e+37
  %v601 = vand.u32 %v589, 2147483648
  %v602 = vor.u32 1.1754944e-38, %v601
  %v603 = vsel %vm600, %v602, %v598
  %v604 = vmul.f32 1.0, %v603
  %v605 = vtanh.pop %v585
  %v606 = vmul.f32 %v604, 0.0
  %608 = vrot.lane.b32.xlu0 %v605, 32
  %v609 = vpop.permute.xlu0 %608
  %v611 = vmul.f32 %v604, %v609
  %613 = vrot.lane.b32.xlu0 %v611, 32
  %v614 = vpop.permute.xlu0 %613
  %v616 = vadd.f32 %v606, %v614
  %v617 = vtanh.pop %v616
  %619 = vrot.lane.b32.xlu0 %v617, 32
  %v620 = vpop.permute.xlu0 %619
  %v622 = vmul.f32 %v604, %v620
  %624 = vrot.lane.b32.xlu0 %v622, 64
  %v625 = vpop.permute.xlu0 %624
  %v627 = vsel %vm57, %v625, 0.0
  %629 = vrot.lane.b32.xlu0 %v616, 96
  %v630 = vpop.permute.xlu0 %629
  %v632 = vsel %vm57, %v630, 0.0
  %v634 = vsel %vm138, %v627, 0
  %636 = vmatpush.msra.mxu0 0.0
  %637 = vmatpush.msra.mxu0 0.0
  %638 = vmatpush.msra.mxu0 0.0
  %639 = vmatpush.msra.mxu0 0.0
  %640 = vmatpush.msra.mxu0 0.0
  %641 = vmatpush.msra.mxu0 0.0
  %642 = vmatpush.msra.mxu0 0.0
  %643 = vmatpush.msra.mxu0 0.0
  %644 = vmatpush.msra.mxu0 0.0
  %645 = vmatpush.msra.mxu0 0.0
  %646 = vmatpush.msra.mxu0 0.0
  %647 = vmatpush.msra.mxu0 0.0
  %648 = vmatpush.msra.mxu0 %v29
  %649 = vmatpush.msra.mxu0 %v28
  %650 = vmatpush.msra.mxu0 %v27
  %651 = vmatpush.msra.mxu0 %v26
  %652 = vmatmul.f32.gmra.mxu0 %v634
  %v653 = vpop.f32.mrf.mxu0
  %v654 = vadd.f32 0.0, %v653
  %655 = vdwg.mxu0
  %v656 = vadd.f32 %v562, %v654
  %v657 = vxor.u32 %v656, 2147483648
  %v658 = vmul.f32 %v657, 1.442695
  %v659 = vpow.pop %v658
  %v660 = vadd.f32 %v659, 1.0
  %v661 = vrcp.pop %v660
  %v662 = vmul.f32 %v660, %v661
  %v663 = vsub.f32 1.0, %v662
  %v664 = vmul.f32 %v661, %v663
  %v665 = vadd.f32 %v661, %v664
  %vm666 = vweird.f32 %v660
  %vm667 = vweird.f32 %v661
  %vm668 = vmor %vm666, %vm667
  %v669 = vsel %vm668, %v661, %v665
  %v670 = vand.u32 2147483647, %v660
  %vm671 = vcmp.eq.f32.partialorder %v670, 8.507059e+37
  %v672 = vand.u32 %v660, 2147483648
  %v673 = vor.u32 1.1754944e-38, %v672
  %v674 = vsel %vm671, %v673, %v669
  %v675 = vmul.f32 1.0, %v674
  %v676 = vtanh.pop %v656
  %678 = vrot.lane.b32.xlu0 %v632, 32
  %v679 = vpop.permute.xlu0 %678
  %v681 = vmul.f32 %v675, %v679
  %683 = vrot.lane.b32.xlu0 %v676, 32
  %v684 = vpop.permute.xlu0 %683
  %v686 = vmul.f32 %v675, %v684
  %688 = vrot.lane.b32.xlu0 %v686, 32
  %v689 = vpop.permute.xlu0 %688
  %v691 = vadd.f32 %v681, %v689
  %v692 = vtanh.pop %v691
  %694 = vrot.lane.b32.xlu0 %v692, 32
  %v695 = vpop.permute.xlu0 %694
  %v697 = vmul.f32 %v675, %v695
  %699 = vrot.lane.b32.xlu0 %v697, 64
  %v700 = vpop.permute.xlu0 %699
  %v702 = vsel %vm69, %v700, %v627
  %704 = vrot.lane.b32.xlu0 %v691, 96
  %v705 = vpop.permute.xlu0 %704
  %v707 = vsel %vm69, %v705, %v632
  %v708 = vsel %vm69, %v700, 0.0
  %v710 = vsel %vm138, %v702, 0
  %712 = vmatpush.msra.mxu0 0.0
  %713 = vmatpush.msra.mxu0 0.0
  %714 = vmatpush.msra.mxu0 0.0
  %715 = vmatpush.msra.mxu0 0.0
  %716 = vmatpush.msra.mxu0 0.0
  %717 = vmatpush.msra.mxu0 0.0
  %718 = vmatpush.msra.mxu0 0.0
  %719 = vmatpush.msra.mxu0 0.0
  %720 = vmatpush.msra.mxu0 0.0
  %721 = vmatpush.msra.mxu0 0.0
  %722 = vmatpush.msra.mxu0 0.0
  %723 = vmatpush.msra.mxu0 0.0
  %724 = vmatpush.msra.mxu0 %v29
  %725 = vmatpush.msra.mxu0 %v28
  %726 = vmatpush.msra.mxu0 %v27
  %727 = vmatpush.msra.mxu0 %v26
  %728 = vmatmul.f32.gmra.mxu0 %v710
  %v729 = vpop.f32.mrf.mxu0
  %v730 = vadd.f32 0.0, %v729
  %731 = vdwg.mxu0
  %v732 = vadd.f32 %v553, %v730
  %v733 = vxor.u32 %v732, 2147483648
  %v734 = vmul.f32 %v733, 1.442695
  %v735 = vpow.pop %v734
  %v736 = vadd.f32 %v735, 1.0
  %v737 = vrcp.pop %v736
  %v738 = vmul.f32 %v736, %v737
  %v739 = vsub.f32 1.0, %v738
  %v740 = vmul.f32 %v737, %v739
  %v741 = vadd.f32 %v737, %v740
  %vm742 = vweird.f32 %v736
  %vm743 = vweird.f32 %v737
  %vm744 = vmor %vm742, %vm743
  %v745 = vsel %vm744, %v737, %v741
  %v746 = vand.u32 2147483647, %v736
  %vm747 = vcmp.eq.f32.partialorder %v746, 8.507059e+37
  %v748 = vand.u32 %v736, 2147483648
  %v749 = vor.u32 1.1754944e-38, %v748
  %v750 = vsel %vm747, %v749, %v745
  %v751 = vmul.f32 1.0, %v750
  %v752 = vtanh.pop %v732
  %754 = vrot.lane.b32.xlu0 %v707, 32
  %v755 = vpop.permute.xlu0 %754
  %v757 = vmul.f32 %v751, %v755
  %759 = vrot.lane.b32.xlu0 %v752, 32
  %v760 = vpop.permute.xlu0 %759
  %v762 = vmul.f32 %v751, %v760
  %764 = vrot.lane.b32.xlu0 %v762, 32
  %v765 = vpop.permute.xlu0 %764
  %v767 = vadd.f32 %v757, %v765
  %v768 = vtanh.pop %v767
  %770 = vrot.lane.b32.xlu0 %v768, 32
  %v771 = vpop.permute.xlu0 %770
  %v773 = vmul.f32 %v751, %v771
  %774 = vrot.lane.b32.xlu0 %v702, 64
  %v775 = vpop.permute.xlu0 %774
  %v777 = vsel %vm75, %v773, %v775
  %v778 = vsel %vm75, %v767, %v755
  %v779 = vsel %vm75, %v773, 0.0
  %781 = vrot.lane.b32.xlu0 %v777, 64
  %v782 = vpop.permute.xlu0 %781
  %v783 = vsel %vm138, %v782, 0
  %785 = vmatpush.msra.mxu0 0.0
  %786 = vmatpush.msra.mxu0 0.0
  %787 = vmatpush.msra.mxu0 0.0
  %788 = vmatpush.msra.mxu0 0.0
  %789 = vmatpush.msra.mxu0 0.0
  %790 = vmatpush.msra.mxu0 0.0
  %791 = vmatpush.msra.mxu0 0.0
  %792 = vmatpush.msra.mxu0 0.0
  %793 = vmatpush.msra.mxu0 0.0
  %794 = vmatpush.msra.mxu0 0.0
  %795 = vmatpush.msra.mxu0 0.0
  %796 = vmatpush.msra.mxu0 0.0
  %797 = vmatpush.msra.mxu0 %v29
  %798 = vmatpush.msra.mxu0 %v28
  %799 = vmatpush.msra.mxu0 %v27
  %800 = vmatpush.msra.mxu0 %v26
  %801 = vmatmul.f32.gmra.mxu0 %v783
  %v802 = vpop.f32.mrf.mxu0
  %v803 = vadd.f32 0.0, %v802
  %804 = vdwg.mxu0
  %v805 = vadd.f32 %v563, %v803
  %v806 = vxor.u32 %v805, 2147483648
  %v807 = vmul.f32 %v806, 1.442695
  %v808 = vpow.pop %v807
  %v809 = vadd.f32 %v808, 1.0
  %v810 = vrcp.pop %v809
  %v811 = vmul.f32 %v809, %v810
  %v812 = vsub.f32 1.0, %v811
  %v813 = vmul.f32 %v810, %v812
  %v814 = vadd.f32 %v810, %v813
  %vm815 = vweird.f32 %v809
  %vm816 = vweird.f32 %v810
  %vm817 = vmor %vm815, %vm816
  %v818 = vsel %vm817, %v810, %v814
  %v819 = vand.u32 2147483647, %v809
  %vm820 = vcmp.eq.f32.partialorder %v819, 8.507059e+37
  %v821 = vand.u32 %v809, 2147483648
  %v822 = vor.u32 1.1754944e-38, %v821
  %v823 = vsel %vm820, %v822, %v818
  %v824 = vmul.f32 1.0, %v823
  %v825 = vtanh.pop %v805
  %v826 = vmul.f32 %v824, %v778
  %828 = vrot.lane.b32.xlu0 %v825, 32
  %v829 = vpop.permute.xlu0 %828
  %v831 = vmul.f32 %v824, %v829
  %833 = vrot.lane.b32.xlu0 %v831, 32
  %v834 = vpop.permute.xlu0 %833
  %v836 = vadd.f32 %v826, %v834
  %v837 = vtanh.pop %v836
  %839 = vrot.lane.b32.xlu0 %v837, 32
  %v840 = vpop.permute.xlu0 %839
  %v842 = vmul.f32 %v824, %v840
  %844 = vrot.lane.b32.xlu0 %v842, 64
  %v845 = vpop.permute.xlu0 %844
  %v848 = vsel %vm77, %v845, %v782
  %850 = vrot.lane.b32.xlu0 %v836, 96
  %v851 = vpop.permute.xlu0 %850
  %854 = vrot.lane.b32.xlu0 %v778, 96
  %v855 = vpop.permute.xlu0 %854
  %v857 = vsel %vm77, %v851, %v855
  %v858 = vsel %vm77, %v845, 0.0
  %v860 = vsel %vm138, %v848, 0
  %862 = vmatpush.msra.mxu0 0.0
  %863 = vmatpush.msra.mxu0 0.0
  %864 = vmatpush.msra.mxu0 0.0
  %865 = vmatpush.msra.mxu0 0.0
  %866 = vmatpush.msra.mxu0 0.0
  %867 = vmatpush.msra.mxu0 0.0
  %868 = vmatpush.msra.mxu0 0.0
  %869 = vmatpush.msra.mxu0 0.0
  %870 = vmatpush.msra.mxu0 0.0
  %871 = vmatpush.msra.mxu0 0.0
  %872 = vmatpush.msra.mxu0 0.0
  %873 = vmatpush.msra.mxu0 0.0
  %874 = vmatpush.msra.mxu0 %v29
  %875 = vmatpush.msra.mxu0 %v28
  %876 = vmatpush.msra.mxu0 %v27
  %877 = vmatpush.msra.mxu0 %v26
  %878 = vmatmul.f32.gmra.mxu0 %v860
  %v879 = vpop.f32.mrf.mxu0
  %v880 = vadd.f32 0.0, %v879
  %881 = vdwg.mxu0
  %v882 = vadd.f32 %v564, %v880
  %v883 = vxor.u32 %v882, 2147483648
  %v884 = vmul.f32 %v883, 1.442695
  %v885 = vpow.pop %v884
  %v886 = vadd.f32 %v885, 1.0
  %v887 = vrcp.pop %v886
  %v888 = vmul.f32 %v886, %v887
  %v889 = vsub.f32 1.0, %v888
  %v890 = vmul.f32 %v887, %v889
  %v891 = vadd.f32 %v887, %v890
  %vm892 = vweird.f32 %v886
  %vm893 = vweird.f32 %v887
  %vm894 = vmor %vm892, %vm893
  %v895 = vsel %vm894, %v887, %v891
  %v896 = vand.u32 2147483647, %v886
  %vm897 = vcmp.eq.f32.partialorder %v896, 8.507059e+37
  %v898 = vand.u32 %v886, 2147483648
  %v899 = vor.u32 1.1754944e-38, %v898
  %v900 = vsel %vm897, %v899, %v895
  %v901 = vmul.f32 1.0, %v900
  %v902 = vtanh.pop %v882
  %904 = vrot.lane.b32.xlu0 %v857, 32
  %v905 = vpop.permute.xlu0 %904
  %v907 = vmul.f32 %v901, %v905
  %909 = vrot.lane.b32.xlu0 %v902, 32
  %v910 = vpop.permute.xlu0 %909
  %v912 = vmul.f32 %v901, %v910
  %914 = vrot.lane.b32.xlu0 %v912, 32
  %v915 = vpop.permute.xlu0 %914
  %v917 = vadd.f32 %v907, %v915
  %v918 = vtanh.pop %v917
  %920 = vrot.lane.b32.xlu0 %v918, 32
  %v921 = vpop.permute.xlu0 %920
  %v923 = vmul.f32 %v901, %v921
  %925 = vrot.lane.b32.xlu0 %v923, 64
  %v926 = vpop.permute.xlu0 %925
  %v928 = vsel %vm79, %v926, 0.0
  %v929 = vsel %vm32, %v627, %v928
  %v930 = vsel %vm32, %v708, %v858
  %v931 = vsel %vm32, %v858, %v708
  %v932 = vsel %vm32, %v928, %v627
  %934 = vrot.lane.b32.xlu0 %v779, 64
  %v935 = vpop.permute.xlu0 %934
  %940 = vrot.lane.b32.xlu0 %v929, 32
  %v941 = vpop.permute.xlu0 %940
  %942 = vrot.lane.b32.xlu0 %v930, 32
  %v943 = vpop.permute.xlu0 %942
  %944 = vrot.lane.b32.xlu0 %v935, 32
  %v945 = vpop.permute.xlu0 %944
  %946 = vrot.lane.b32.xlu0 %v931, 32
  %v947 = vpop.permute.xlu0 %946
  %948 = vrot.lane.b32.xlu0 %v932, 32
  %v949 = vpop.permute.xlu0 %948
  %v955 = vsel %vm138, %v506, %v941
  %v956 = vsel %vm138, %v507, %v943
  %v957 = vsel %vm138, %v512, %v945
  %v958 = vsel %vm138, %v508, %v947
  %v959 = vsel %vm138, %v509, %v949
  %vm960 = vcmask 523264
  %961 = vst.msk [vmem:[%s3] sm:$0xff] %vm960, %v955
  %962 = vst.msk [vmem:[%s3 + $0x8] sm:$0xff] %vm960, %v956
  %963 = vst.msk [vmem:[%s3 + $0x10] sm:$0xff] %vm960, %v957
  %964 = vst.msk [vmem:[%s3 + $0x18] sm:$0xff] %vm960, %v958
  %965 = vst.msk [vmem:[%s3 + $0x20] sm:$0xff] %vm960, %v959
  // Predicated region
  $region14: #{evolution_forward.1} parent=0 // pred_check
    _
  $region15: #{evolution_forward.1} parent=0 // pred_check_branch
    %967 = sbr.rel (0) target = $region17
  $region16: #{evolution_forward.1} parent=0 // pred_region
    _
  $region17: #{evolution_forward.1} parent=0 // pred_fallthru
    _
  // Predicated region
  $region18: #{evolution_forward.1} parent=0 // pred_check
    _
  $region19: #{evolution_forward.1} parent=0 // pred_check_branch
    %969 = sbr.rel (0) target = $region21
  $region20: #{evolution_forward.1} parent=0 // pred_region
    _
  $region21: #{evolution_forward.1} parent=0 // pred_fallthru
    _

</llo_original>
